<compile_context>
chip_gen: v7x
topology: tpu7x:2x2x1
jax: 0.10.0
libtpu: 0.0.40
codegen_flags: <defaults>
</compile_context>

<pallas_src>
import jax
import jax.numpy as jnp
from jax.experimental import pallas as pl
from jax.experimental.pallas import tpu as pltpu


def _round_up(x, m):
    return ((x + m - 1) // m) * m


def _cdiv(a, b):
    return -(-a // b)


def _supports_pipeline_mode():
    """Feature-detect BlockSpec(pipeline_mode=pl.Buffered(...)) (no broad except)."""
    if not hasattr(pl, "Buffered"):
        return False
    try:
        pl.BlockSpec((8, 128), lambda i: (i, 0),
                     pipeline_mode=pl.Buffered(buffer_count=1))
    except TypeError:
        return False
    return True


_HAS_PIPELINE_MODE = _supports_pipeline_mode()


def _vmem_budget_bytes():
    """Per-generation budget for tile buffers (v7x: 64 MiB VMEM, v5e/v6e: 128 MiB)."""
    default = 24 * 1024 * 1024
    get_info = getattr(pltpu, "get_tpu_info", None)
    if get_info is None:
        return default
    try:
        cap = int(get_info().vmem_capacity_bytes)
    except Exception:  # hardware-info query only; falls back to the safe default
        return default
    # ~3/8 of physical VMEM: 24 MiB on v7x (64 MiB), 48 MiB on v5e/v6e (128 MiB).
    return max(default, min((cap * 3) // 8, 56 * 1024 * 1024))


def _buf_bytes(rows, cols):
    # f32 VMEM buffer footprint including (8, 128) layout padding.
    return 4 * _round_up(max(rows, 1), 8) * _round_up(max(cols, 1), 128)


def _make_mclr_kernel(d_total, tk, k_tiles):
    ragged_k = (k_tiles > 1) and (d_total % tk != 0)

    def kernel(x_ref, w_ref, b_ref, o_ref):
        # x_ref: (tile_n, tk), w_ref: (tk, tc), b_ref: (1, tc), o_ref: (tile_n, tc)
        k = pl.program_id(2)
        x = x_ref[...]
        if ragged_k:
            # The last K tile reads past the true feature dim; those columns
            # are unspecified, so zero them (W's padded rows are zero but
            # garbage * 0 could be NaN).  Cheap VPU work, hidden under DMA.
            col = jax.lax.broadcasted_iota(jnp.int32, x.shape, 1)
            x = jnp.where(col + k * tk < d_total, x, 0.0)

        partial = jnp.dot(x, w_ref[...], preferred_element_type=jnp.float32)

        if k_tiles == 1:
            o_ref[...] = partial + b_ref[...]
        else:
            @pl.when(k == 0)
            def _():
                # Fold the bias into the first K step: no zero-init store and
                # no extra bias pass over the resident output block.
                o_ref[...] = partial + b_ref[...]

            @pl.when(k > 0)
            def _():
                o_ref[...] += partial

    return kernel


def mclr_forward(X, W, b, *, use_pallas=None, _max_tk=None):
    """logits = X @ W + b (MCLR.forward).

    X: [N, D], W: [D, C], b: [1, C]  ->  [N, C] float32.
    use_pallas: None = auto heuristic, True/False to force a path.
    _max_tk: test-only cap on the contraction tile (forces K tiling).
    """
    N, D = X.shape
    D2, C = W.shape
    assert D == D2 and b.shape == (1, C)

    X = X.astype(jnp.float32)
    W = W.astype(jnp.float32)
    b = b.astype(jnp.float32)

    if use_pallas is None:
        # Tiny problems: XLA's fused matmul beats pallas_call overheads.
        use_pallas = (N * D * C) >= 1_000_000
    if not use_pallas:
        return jnp.dot(X, W, precision=jax.lax.Precision.HIGHEST) + b

    budget = _vmem_budget_bytes()

    # ---- class tiling: keep the true C as the last block dim ---------------
    if C <= 1024:
        tc, c_tiles = C, 1
    else:
        tc, c_tiles = 1024, _cdiv(C, 1024)   # ragged class edge is masked by Pallas

    # ---- X multi-buffer depth (deeper prefetch on 128 MiB parts) -----------
    x_bufs = 3 if (_HAS_PIPELINE_MODE and budget >= 40 * 1024 * 1024) else 2
    w_bufs_single = 1 if (_HAS_PIPELINE_MODE and c_tiles == 1) else 2

    def _tile_bytes(tile_n, tk, w_bufs):
        return (x_bufs * _buf_bytes(tile_n, tk)
                + w_bufs * _buf_bytes(tk, tc)
                + 2 * _buf_bytes(1, tc)
                + 2 * _buf_bytes(tile_n, tc))

    # ---- contraction tiling: prefer a single K tile -------------------------
    if (_max_tk is None or D <= _max_tk) and \
            _tile_bytes(256, D, w_bufs_single) <= budget:
        tk, k_tiles, d_pad = D, 1, D          # no D padding, no masking
    else:
        hi = min(_round_up(D, 128),
                 4096 if _max_tk is None else max(128, _round_up(_max_tk, 128)))
        best = None
        for t in range(128, hi + 1, 128):
            if _tile_bytes(256, t, 2) > budget:
                continue
            pad = _round_up(D, t) - D
            key = (pad, -t)                   # min zero-padding, then larger tk
            if best is None or key < best[0]:
                best = (key, t)
        tk = best[1] if best is not None else 128
        d_pad = _round_up(D, tk)
        k_tiles = d_pad // tk

    w_bufs = w_bufs_single if (k_tiles == 1 and c_tiles == 1) else 2

    # ---- sample tile: big, budget-constrained; X is never padded/copied -----
    tile_cap = 2048
    if N >= 512:
        # >= 2 sample tiles so both v7x TensorCores get work.
        tile_cap = min(tile_cap, _round_up(_cdiv(N, 2), 256))
    while tile_cap > 256 and _tile_bytes(tile_cap, tk, w_bufs) > budget:
        tile_cap -= 256
    tile_n = max(8, min(tile_cap, _round_up(N, 8)))
    n_tiles = _cdiv(N, tile_n)

    # Only W (small) is zero-padded, and only when K is tiled.
    Wp = jnp.pad(W, ((0, d_pad - D), (0, 0))) if d_pad != D else W

    vmem_limit = int(min(max(_tile_bytes(tile_n, tk, w_bufs) + 8 * 1024 * 1024,
                             32 * 1024 * 1024),
                         budget + 16 * 1024 * 1024))

    use_x3 = (x_bufs == 3 and n_tiles * k_tiles >= 3)

    def _spec(shape, index_map, bufs=None):
        if bufs is not None and _HAS_PIPELINE_MODE:
            return pl.BlockSpec(shape, index_map,
                                pipeline_mode=pl.Buffered(buffer_count=bufs))
        return pl.BlockSpec(shape, index_map)

    in_specs = [
        _spec((tile_n, tk), lambda i, j, k: (i, k),
              bufs=3 if use_x3 else None),
        _spec((tk, tc), lambda i, j, k: (k, j),
              bufs=1 if (k_tiles == 1 and c_tiles == 1) else None),
        _spec((1, tc), lambda i, j, k: (0, j),
              bufs=1 if c_tiles == 1 else None),
    ]
    out_spec = pl.BlockSpec((tile_n, tc), lambda i, j, k: (i, j))

    kernel = _make_mclr_kernel(D, tk, k_tiles)

    return pl.pallas_call(
        kernel,
        out_shape=jax.ShapeDtypeStruct((N, C), jnp.float32),
        grid_spec=pltpu.PrefetchScalarGridSpec(
            num_scalar_prefetch=0,
            grid=(n_tiles, c_tiles, k_tiles),
            in_specs=in_specs,
            out_specs=out_spec,
        ),
        compiler_params=pltpu.CompilerParams(
            dimension_semantics=("parallel", "parallel", "arbitrary"),
            vmem_limit_bytes=vmem_limit,
        ),
    )(X, Wp, b)


if __name__ == "__main__":
    key = jax.random.PRNGKey(0)

    def ref_logits(X, W, b):
        return jnp.dot(X, W, precision=jax.lax.Precision.HIGHEST) + b

    # 1) Spec-sized case (MCLR(dim=32, n_classes=8), 16 samples), forced
    #    through the Pallas kernel; auto mode takes the XLA fast path.
    n_samples, dim, n_classes = 16, 32, 8
    kx, kw, kb, key = jax.random.split(key, 4)
    X = jax.random.normal(kx, (n_samples, dim), dtype=jnp.float32)
    W = jax.random.normal(kw, (dim, n_classes), dtype=jnp.float32) * 0.001
    b = jax.random.normal(kb, (1, n_classes), dtype=jnp.float32) * 0.001
    out = jax.block_until_ready(mclr_forward(X, W, b, use_pallas=True))
    assert out.shape == (n_samples, n_classes)
    assert jnp.allclose(out, ref_logits(X, W, b), atol=1e-5, rtol=1e-5)
    out_auto = jax.block_until_ready(mclr_forward(X, W, b))   # fast path
    assert jnp.allclose(out_auto, ref_logits(X, W, b), atol=1e-5, rtol=1e-5)

    # 2) Odd, unaligned shapes: ragged sample block + unaligned D and C.
    kx, kw, kb, key = jax.random.split(key, 4)
    X2 = jax.random.normal(kx, (37, 50), dtype=jnp.float32)
    W2 = jax.random.normal(kw, (50, 7), dtype=jnp.float32) * 0.001
    b2 = jax.random.normal(kb, (1, 7), dtype=jnp.float32) * 0.001
    out2 = jax.block_until_ready(mclr_forward(X2, W2, b2, use_pallas=True))
    assert jnp.allclose(out2, ref_logits(X2, W2, b2), atol=1e-4, rtol=1e-4)

    # 3) K-tiled accumulation path with a ragged contraction tile (300 % 128).
    kx, kw, kb, key = jax.random.split(key, 4)
    X3 = jax.random.normal(kx, (72, 300), dtype=jnp.float32)
    W3 = jax.random.normal(kw, (300, 5), dtype=jnp.float32) * 0.001
    b3 = jax.random.normal(kb, (1, 5), dtype=jnp.float32) * 0.001
    out3 = jax.block_until_ready(
        mclr_forward(X3, W3, b3, use_pallas=True, _max_tk=128))
    assert jnp.allclose(out3, ref_logits(X3, W3, b3), atol=1e-4, rtol=1e-4)

    # 4) Larger auto-dispatched case: 2 sample tiles (ragged last), single K tile.
    kx, kw, kb, key = jax.random.split(key, 4)
    X4 = jax.random.normal(kx, (2300, 1152), dtype=jnp.float32)
    W4 = jax.random.normal(kw, (1152, 10), dtype=jnp.float32) * 0.001
    b4 = jax.random.normal(kb, (1, 10), dtype=jnp.float32) * 0.001
    out4 = jax.block_until_ready(mclr_forward(X4, W4, b4))
    assert out4.shape == (2300, 10)
    assert jnp.allclose(out4, ref_logits(X4, W4, b4), atol=1e-4, rtol=1e-3)

    print("KERNEL_OK")
</pallas_src>

<mosaic_0001>
module attributes {stable_mosaic.version = 11 : i64} {
  func.func @kernel(%arg0: i32, %arg1: i32, %arg2: i32, %arg3: memref<16x32xf32, #tpu.memory_space<vmem>>, %arg4: memref<32x8xf32, #tpu.memory_space<vmem>>, %arg5: memref<1x8xf32, #tpu.memory_space<vmem>>, %arg6: memref<16x8xf32, #tpu.memory_space<vmem>>) attributes {dimension_semantics = [#tpu.dimension_semantics<parallel>, #tpu.dimension_semantics<parallel>, #tpu.dimension_semantics<arbitrary>], iteration_bounds = array<i64: 1, 1, 1>, scalar_prefetch = 0 : i64, scratch_operands = 0 : i64, tpu.core_type = #tpu.core_type<tc>, window_params = [{transform_indices = @transform_0, window_bounds = array<i64: 16, 32>}, {pipeline_mode = #tpu.pipeline_mode<synchronous>, transform_indices = @transform_1, window_bounds = array<i64: 32, 8>}, {pipeline_mode = #tpu.pipeline_mode<synchronous>, transform_indices = @transform_2, window_bounds = array<i64: 1, 8>}, {transform_indices = @transform_3, window_bounds = array<i64: 16, 8>}]} {
    %c0 = arith.constant 0 : index
    %c0_0 = arith.constant 0 : index
    %0 = vector.load %arg3[%c0, %c0_0] : memref<16x32xf32, #tpu.memory_space<vmem>>, vector<16x32xf32>
    %c0_1 = arith.constant 0 : index
    %c0_2 = arith.constant 0 : index
    %1 = vector.load %arg4[%c0_1, %c0_2] : memref<32x8xf32, #tpu.memory_space<vmem>>, vector<32x8xf32>
    %cst = arith.constant dense<0.000000e+00> : vector<16x8xf32>
    %2 = tpu.matmul %0, %1, %cst {dimension_numbers = #tpu.dot_dimension_numbers<[1], [0], [0], [1], [0, 0, 1, 1], [], []>} : vector<16x32xf32>, vector<32x8xf32>, vector<16x8xf32> -> vector<16x8xf32>
    %c0_3 = arith.constant 0 : index
    %c0_4 = arith.constant 0 : index
    %3 = vector.load %arg5[%c0_3, %c0_4] : memref<1x8xf32, #tpu.memory_space<vmem>>, vector<1x8xf32>
    %4 = vector.broadcast %3 : vector<1x8xf32> to vector<16x8xf32>
    %5 = arith.addf %2, %4 : vector<16x8xf32>
    %c0_5 = arith.constant 0 : index
    %c0_6 = arith.constant 0 : index
    %6 = vector.load %arg6[%c0_5, %c0_6] : memref<16x8xf32, #tpu.memory_space<vmem>>, vector<16x8xf32>
    tpu.vector_store %arg6[%c0_5, %c0_6], %5 {strides = array<i32>} : memref<16x8xf32, #tpu.memory_space<vmem>>, vector<16x8xf32>,
    return
  }
  func.func @transform_0(%arg0: i32, %arg1: i32, %arg2: i32) -> (i32, i32) {
    %c0_i32 = arith.constant 0 : i32
    return %arg0, %arg2 : i32, i32
  }
  func.func @transform_1(%arg0: i32, %arg1: i32, %arg2: i32) -> (i32, i32) {
    %c0_i32 = arith.constant 0 : i32
    return %arg2, %arg1 : i32, i32
  }
  func.func @transform_2(%arg0: i32, %arg1: i32, %arg2: i32) -> (i32, i32) {
    %c0_i32 = arith.constant 0 : i32
    %c0_i32_0 = arith.constant 0 : i32
    return %c0_i32, %arg1 : i32, i32
  }
  func.func @transform_3(%arg0: i32, %arg1: i32, %arg2: i32) -> (i32, i32) {
    %c0_i32 = arith.constant 0 : i32
    return %arg0, %arg1 : i32, i32
  }
}

</mosaic_0001>

<llo_original>
// kernel: tpu_custom_call.1
$region0: #{tpu_custom_call.1}
  #allocation0 [shape = 'u32[]', space=smem, size = 0x4, offset = 0x4, fixed_abs, tag = 'smem constant byte address 0x4 - core index']
  #allocation1 [shape = 'u32[144,128]{1,0:T(1,128)}', space=vmem, size = 0x12000, scoped, tag = 'internal scratch']
  %s0 = inlined_call_operand.vmem [shape: f32[16,32], index: 0, kind: input, shape index: {}]
  %s1 = inlined_call_operand.vmem [shape: f32[32,8], index: 1, kind: input, shape index: {}]
  %s2 = inlined_call_operand.vmem [shape: f32[1,8], index: 2, kind: input, shape index: {}]
  %s3 = inlined_call_operand.vmem [shape: f32[16,8], index: 3, kind: output, shape index: {}]
  %s4 = sld [smem:[#allocation0]]
  $region22: #{tpu_custom_call.1} parent=0
    _
  %s6 = ssub.s32 1, %s4
  %s7 = scalar_select 0, %s6, %s4
  // Predicated region
  $region2: #{tpu_custom_call.1} parent=0 // pred_check
    _
  $region3: #{tpu_custom_call.1} parent=0 // pred_check_branch
    %9 = sbr.rel (0) target = $region5
  $region4: #{tpu_custom_call.1} parent=0 // pred_region
    _
  $region5: #{tpu_custom_call.1} parent=0 // pred_fallthru
    _
  // Predicated region
  $region6: #{tpu_custom_call.1} parent=0 // pred_check
    _
  $region7: #{tpu_custom_call.1} parent=0 // pred_check_branch
    %11 = sbr.rel (0) target = $region9
  $region8: #{tpu_custom_call.1} parent=0 // pred_region
    _
  $region9: #{tpu_custom_call.1} parent=0 // pred_fallthru
    _
  // Predicated region
  $region10: #{tpu_custom_call.1} parent=0 // pred_check
    _
  $region11: #{tpu_custom_call.1} parent=0 // pred_check_branch
    %13 = sbr.rel (0) target = $region13
  $region12: #{tpu_custom_call.1} parent=0 // pred_region
    _
  $region13: #{tpu_custom_call.1} parent=0 // pred_fallthru
    _
  %v14 = vld [vmem:[%s0] sm:$0xff]
  %v15 = vld [vmem:[%s0 + $0x8] sm:$0xff]
  %v16 = vld [vmem:[%s1] sm:$0xff]
  %v17 = vld [vmem:[%s1 + $0x8] sm:$0xff]
  %v18 = vld [vmem:[%s1 + $0x10] sm:$0xff]
  %v19 = vld [vmem:[%s1 + $0x18] sm:$0xff]
  %v20 = vld [vmem:[%s2] sm:$0x1]
  %v22 = vlaneseq
  %v23 = vshrl.u32 %v22, 7
  %v24 = vsub.s32 0, %v23
  %v25 = vrot.slane %v20, %v24
  %vm27 = vcmask 261120
  %v29 = vsel %vm27, %v14, 0
  %v32 = vsel %vm27, %v15, 0
  %34 = vmatprep.subr.mxu0 0.0
  %35 = vmatpush1.msra.mxu0 %v16
  %36 = vmatprep.subr.mxu0 0.0
  %37 = vmatpush1.msra.mxu0 %v17
  %38 = vmatprep.subr.mxu0 0.0
  %39 = vmatpush1.msra.mxu0 %v18
  %40 = vmatprep.subr.mxu0 0.0
  %41 = vmatpush1.msra.mxu0 %v19
  %42 = vmatprep.subr.mxu0 0.0
  %43 = vmatpush1.msra.mxu0 0.0
  %44 = vmatprep.subr.mxu0 0.0
  %45 = vmatpush1.msra.mxu0 0.0
  %46 = vmatprep.subr.mxu0 0.0
  %47 = vmatpush1.msra.mxu0 0.0
  %48 = vmatprep.subr.mxu0 0.0
  %49 = vmatpush1.msra.mxu0 0.0
  %50 = vmatprep.subr.mxu0 0.0
  %51 = vmatpush1.msra.mxu0 0.0
  %52 = vmatprep.subr.mxu0 0.0
  %53 = vmatpush1.msra.mxu0 0.0
  %54 = vmatprep.subr.mxu0 0.0
  %55 = vmatpush1.msra.mxu0 0.0
  %56 = vmatprep.subr.mxu0 0.0
  %57 = vmatpush1.msra.mxu0 0.0
  %58 = vmatprep.subr.mxu0 0.0
  %59 = vmatpush1.msra.mxu0 0.0
  %60 = vmatprep.subr.mxu0 0.0
  %61 = vmatpush1.msra.mxu0 0.0
  %62 = vmatprep.subr.mxu0 0.0
  %63 = vmatpush1.msra.mxu0 0.0
  %64 = vmatprep.subr.mxu0 0.0
  %65 = vmatpush1.msra.mxu0 0.0
  %66 = vmatprep.subr.mxu0 0.0
  %67 = vmatpush1.msra.mxu0 0.0
  %68 = vmatprep.subr.mxu0 0.0
  %69 = vmatpush1.msra.mxu0 0.0
  %70 = vmatprep.subr.mxu0 0.0
  %71 = vmatpush1.msra.mxu0 0.0
  %72 = vmatprep.subr.mxu0 0.0
  %73 = vmatpush1.msra.mxu0 0.0
  %74 = vmatprep.subr.mxu0 0.0
  %75 = vmatpush1.msra.mxu0 0.0
  %76 = vmatprep.subr.mxu0 0.0
  %77 = vmatpush1.msra.mxu0 0.0
  %78 = vmatprep.subr.mxu0 0.0
  %79 = vmatpush1.msra.mxu0 0.0
  %80 = vmatprep.subr.mxu0 0.0
  %81 = vmatpush1.msra.mxu0 0.0
  %82 = vmatprep.subr.mxu0 0.0
  %83 = vmatpush1.msra.mxu0 0.0
  %84 = vmatprep.subr.mxu0 0.0
  %85 = vmatpush1.msra.mxu0 0.0
  %86 = vmatprep.subr.mxu0 0.0
  %87 = vmatpush1.msra.mxu0 0.0
  %88 = vmatprep.subr.mxu0 0.0
  %89 = vmatpush1.msra.mxu0 0.0
  %90 = vmatprep.subr.mxu0 0.0
  %91 = vmatpush1.msra.mxu0 0.0
  %92 = vmatprep.subr.mxu0 0.0
  %93 = vmatpush1.msra.mxu0 0.0
  %94 = vmatprep.subr.mxu0 0.0
  %95 = vmatpush1.msra.mxu0 0.0
  %96 = vmatprep.subr.mxu0 0.0
  %97 = vmatpush1.msra.mxu0 0.0
  %98 = vmatprep.mubr.f32.mxu0 0.0
  %99 = vmatmul.mubr.f32.gmra.mrb[0].mxu0 %v29
  %v100 = vpop.f32.mrb[0].mxu0
  %v101 = vadd.f32 %v25, %v100
  %v102 = vpop.f32.mrb[0].mxu0
  %103 = vmatprep.mubr.f32.mxu0 0.0
  %104 = vmatmul.mubr.f32.gmra.mrb[0].mxu0 %v32
  %v105 = vpop.f32.mrb[0].mxu0
  %v106 = vadd.f32 %v25, %v105
  %v107 = vpop.f32.mrb[0].mxu0
  %108 = vdwg.mxu0
  %vm109 = vcmask 64512
  %110 = vst.msk [vmem:[%s3] sm:$0xff] %vm109, %v101
  %111 = vst.msk [vmem:[%s3 + $0x8] sm:$0xff] %vm109, %v106
  // Predicated region
  $region14: #{tpu_custom_call.1} parent=0 // pred_check
    _
  $region15: #{tpu_custom_call.1} parent=0 // pred_check_branch
    %113 = sbr.rel (0) target = $region17
  $region16: #{tpu_custom_call.1} parent=0 // pred_region
    _
  $region17: #{tpu_custom_call.1} parent=0 // pred_fallthru
    _
  // Predicated region
  $region18: #{tpu_custom_call.1} parent=0 // pred_check
    _
  $region19: #{tpu_custom_call.1} parent=0 // pred_check_branch
    %115 = sbr.rel (0) target = $region21
  $region20: #{tpu_custom_call.1} parent=0 // pred_region
    _
  $region21: #{tpu_custom_call.1} parent=0 // pred_fallthru
    _

</llo_original>
